<compile_context>
chip_gen: v5e
topology: v5e:2x2
jax: 0.10.0
libtpu: 0.0.40
codegen_flags: <defaults>
</compile_context>

<pallas_src>
import jax
import jax.numpy as jnp
from jax.experimental import pallas as pl
from jax.experimental.pallas import tpu as pltpu

N_EXPERTS = 5
H1 = 10   # hidden 1 (gating and experts)
H2 = 20   # expert hidden 2


def moe_kernel(xt_ref,
               w1g_ref, b1g_ref,      # gating layer 1:  (10, 1), (10, 1)
               gw2t_ref, gb2_ref,     # gating layer 2:  (5, 10), (5, 1)
               w1e_ref, b1e_ref,      # expert layer 1:  (50, 1), (50, 1)
               ew2t_ref, eb2_ref,     # expert layer 2:  (100, 50) block-diag, (100, 1)
               ew3t_ref, eb3_ref,     # expert layer 3:  (5, 100) block-diag,  (5, 1)
               out_ref):
    x = xt_ref[...]                                                       # (1, TBL)

    # ---- first layers: Linear(1, H) == lane-dense broadcast MAC (K=1, VPU) ----
    h1g = jnp.maximum(w1g_ref[...] * x + b1g_ref[...], 0.0)              # (10, TBL)
    h1e = jnp.maximum(w1e_ref[...] * x + b1e_ref[...], 0.0)              # (50, TBL)

    # ---- gating: logits + softmax over the expert (sublane) axis ----
    logits = jnp.dot(gw2t_ref[...], h1g,
                     preferred_element_type=jnp.float32) + gb2_ref[...]  # (5, TBL)
    m = jnp.max(logits, axis=0, keepdims=True)
    e = jnp.exp(logits - m)
    denom = jnp.sum(e, axis=0, keepdims=True)
    gates = e * pl.reciprocal(denom, approx=False)                        # (5, TBL)

    # ---- fused experts: block-diagonal layer 2 / layer 3 (MXU) ----
    h2 = jnp.maximum(
        jnp.dot(ew2t_ref[...], h1e, preferred_element_type=jnp.float32)
        + eb2_ref[...], 0.0)                                              # (100, TBL)
    eo = jnp.dot(ew3t_ref[...], h2,
                 preferred_element_type=jnp.float32) + eb3_ref[...]       # (5, TBL)

    # ---- combine: sum_e gates[e] * expert_out[e]  (single sublane reduce) ----
    out_ref[...] = jnp.sum(gates * eo, axis=0, keepdims=True).astype(out_ref.dtype)


def _fuse_params(p):
    """Re-pack per-expert params into transposed / block-diagonal form (tiny, done outside the kernel)."""
    w1g = p["gw1"].T                                                        # (10, 1)
    b1g = p["gb1"].T                                                        # (10, 1)
    gw2t = p["gw2"].T                                                       # (5, 10)
    gb2 = p["gb2"].T                                                        # (5, 1)
    w1e = jnp.transpose(p["ew1"], (0, 2, 1)).reshape(N_EXPERTS * H1, 1)     # (50, 1)
    b1e = jnp.transpose(p["eb1"], (0, 2, 1)).reshape(N_EXPERTS * H1, 1)     # (50, 1)
    ew2t = jax.scipy.linalg.block_diag(
        *[p["ew2"][e].T for e in range(N_EXPERTS)])                         # (100, 50)
    eb2 = jnp.transpose(p["eb2"], (0, 2, 1)).reshape(N_EXPERTS * H2, 1)     # (100, 1)
    ew3t = jax.scipy.linalg.block_diag(
        *[p["ew3"][e].T for e in range(N_EXPERTS)])                         # (5, 100)
    eb3 = p["eb3"].reshape(N_EXPERTS, 1)                                    # (5, 1)
    return (w1g, b1g, gw2t, gb2, w1e, b1e, ew2t, eb2, ew3t, eb3)


def mixture_of_experts(x, params, tbl=1024):
    """x: (B, 1) float32.  params: dict from init_params().  Returns (B, 1) float32."""
    assert x.ndim == 2 and x.shape[1] == 1
    assert tbl % 128 == 0
    B = x.shape[0]
    fused = _fuse_params(params)

    # Lane-dense, transposed layout: batch on the 128-lane axis, padded to whole tiles.
    Bp = pl.cdiv(B, tbl) * tbl
    xt = jnp.pad(x[:, 0].astype(jnp.float32), (0, Bp - B)).reshape(1, Bp)

    def _resident_spec(a):
        nd = a.ndim
        # Bind rank via a default argument -> no late-binding closure bug.
        # Constant block index keeps the weight block VMEM-resident across grid steps.
        return pl.BlockSpec(a.shape, lambda i, _nd=nd: (0,) * _nd)

    in_specs = ([pl.BlockSpec((1, tbl), lambda i: (0, i))] +
                [_resident_spec(a) for a in fused])
    out_spec = pl.BlockSpec((1, tbl), lambda i: (0, i))

    out_t = pl.pallas_call(
        moe_kernel,
        out_shape=jax.ShapeDtypeStruct((1, Bp), jnp.float32),
        grid=(Bp // tbl,),
        in_specs=in_specs,
        out_specs=out_spec,
        compiler_params=pltpu.CompilerParams(dimension_semantics=("parallel",)),
    )(xt, *fused)
    return out_t[0, :B].reshape(B, 1)


def init_params(key):
    """Synthetic parameters matching the torch module's shapes.

    Weights stored as (in_features, out_features); biases as (1, out) or (E, 1, out).
    """
    ks = jax.random.split(key, 10)
    scale = 0.1
    return {
        # gating network
        "gw1": scale * jax.random.normal(ks[0], (1, H1), jnp.float32),
        "gb1": scale * jax.random.normal(ks[1], (1, H1), jnp.float32),
        "gw2": scale * jax.random.normal(ks[2], (H1, N_EXPERTS), jnp.float32),
        "gb2": scale * jax.random.normal(ks[3], (1, N_EXPERTS), jnp.float32),
        # experts, stacked on leading axis E
        "ew1": scale * jax.random.normal(ks[4], (N_EXPERTS, 1, H1), jnp.float32),
        "eb1": scale * jax.random.normal(ks[5], (N_EXPERTS, 1, H1), jnp.float32),
        "ew2": scale * jax.random.normal(ks[6], (N_EXPERTS, H1, H2), jnp.float32),
        "eb2": scale * jax.random.normal(ks[7], (N_EXPERTS, 1, H2), jnp.float32),
        "ew3": scale * jax.random.normal(ks[8], (N_EXPERTS, H2, 1), jnp.float32),
        "eb3": scale * jax.random.normal(ks[9], (N_EXPERTS, 1, 1), jnp.float32),
    }


def reference_moe(x, p):
    """Pure-JAX reference matching the PyTorch forward exactly (high-precision matmuls)."""
    hp = jax.lax.Precision.HIGHEST
    gh = jnp.maximum(jnp.dot(x, p["gw1"], precision=hp) + p["gb1"], 0.0)
    logits = jnp.dot(gh, p["gw2"], precision=hp) + p["gb2"]
    gates = jax.nn.softmax(logits, axis=1)                                # (B, E)
    outs = []
    for e in range(N_EXPERTS):
        h1 = jnp.maximum(jnp.dot(x, p["ew1"][e], precision=hp) + p["eb1"][e], 0.0)
        h2 = jnp.maximum(jnp.dot(h1, p["ew2"][e], precision=hp) + p["eb2"][e], 0.0)
        outs.append(jnp.dot(h2, p["ew3"][e], precision=hp) + p["eb3"][e])  # (B, 1)
    expert_outputs = jnp.stack(outs, axis=1)                               # (B, E, 1)
    return jnp.sum(gates[:, :, None] * expert_outputs, axis=1)             # (B, 1)


if __name__ == "__main__":
    key = jax.random.PRNGKey(0)
    kx1, kx2, kp = jax.random.split(key, 3)
    params = init_params(kp)

    # Case 1: multi-step grid with tail padding (B not a multiple of the tile).
    B1 = 300
    x1 = jax.random.normal(kx1, (B1, 1), jnp.float32)
    out1 = jax.block_until_ready(mixture_of_experts(x1, params, tbl=256))
    ref1 = reference_moe(x1, params)
    assert out1.shape == (B1, 1)
    # Tolerance sized for MXU f32 matmuls possibly using bf16-decomposed passes internally.
    assert jnp.allclose(out1, ref1, atol=2e-3, rtol=2e-3), \
        float(jnp.max(jnp.abs(out1 - ref1)))

    # Case 2: batch smaller than one tile (exercises the padding-only, single-step path
    # and the larger default tile).
    B2 = 40
    x2 = jax.random.normal(kx2, (B2, 1), jnp.float32)
    out2 = jax.block_until_ready(mixture_of_experts(x2, params))
    ref2 = reference_moe(x2, params)
    assert out2.shape == (B2, 1)
    assert jnp.allclose(out2, ref2, atol=2e-3, rtol=2e-3), \
        float(jnp.max(jnp.abs(out2 - ref2)))

    print("KERNEL_OK")
</pallas_src>

<mosaic_0001>
module attributes {stable_mosaic.version = 11 : i64} {
  func.func @moe_kernel(%arg0: i32, %arg1: memref<1x256xf32, #tpu.memory_space<vmem>>, %arg2: memref<10x1xf32, #tpu.memory_space<vmem>>, %arg3: memref<10x1xf32, #tpu.memory_space<vmem>>, %arg4: memref<5x10xf32, #tpu.memory_space<vmem>>, %arg5: memref<5x1xf32, #tpu.memory_space<vmem>>, %arg6: memref<50x1xf32, #tpu.memory_space<vmem>>, %arg7: memref<50x1xf32, #tpu.memory_space<vmem>>, %arg8: memref<100x50xf32, #tpu.memory_space<vmem>>, %arg9: memref<100x1xf32, #tpu.memory_space<vmem>>, %arg10: memref<5x100xf32, #tpu.memory_space<vmem>>, %arg11: memref<5x1xf32, #tpu.memory_space<vmem>>, %arg12: memref<1x256xf32, #tpu.memory_space<vmem>>) attributes {dimension_semantics = [#tpu.dimension_semantics<parallel>], iteration_bounds = array<i64: 2>, scalar_prefetch = 0 : i64, scratch_operands = 0 : i64, tpu.core_type = #tpu.core_type<tc>, window_params = [{transform_indices = @transform_0, window_bounds = array<i64: 1, 256>}, {pipeline_mode = #tpu.pipeline_mode<synchronous>, transform_indices = @transform_1, window_bounds = array<i64: 10, 1>}, {pipeline_mode = #tpu.pipeline_mode<synchronous>, transform_indices = @transform_2, window_bounds = array<i64: 10, 1>}, {pipeline_mode = #tpu.pipeline_mode<synchronous>, transform_indices = @transform_3, window_bounds = array<i64: 5, 10>}, {pipeline_mode = #tpu.pipeline_mode<synchronous>, transform_indices = @transform_4, window_bounds = array<i64: 5, 1>}, {pipeline_mode = #tpu.pipeline_mode<synchronous>, transform_indices = @transform_5, window_bounds = array<i64: 50, 1>}, {pipeline_mode = #tpu.pipeline_mode<synchronous>, transform_indices = @transform_6, window_bounds = array<i64: 50, 1>}, {pipeline_mode = #tpu.pipeline_mode<synchronous>, transform_indices = @transform_7, window_bounds = array<i64: 100, 50>}, {pipeline_mode = #tpu.pipeline_mode<synchronous>, transform_indices = @transform_8, window_bounds = array<i64: 100, 1>}, {pipeline_mode = #tpu.pipeline_mode<synchronous>, transform_indices = @transform_9, window_bounds = array<i64: 5, 100>}, {pipeline_mode = #tpu.pipeline_mode<synchronous>, transform_indices = @transform_10, window_bounds = array<i64: 5, 1>}, {transform_indices = @transform_11, window_bounds = array<i64: 1, 256>}]} {
    %c0 = arith.constant 0 : index
    %c0_0 = arith.constant 0 : index
    %0 = vector.load %arg1[%c0, %c0_0] : memref<1x256xf32, #tpu.memory_space<vmem>>, vector<1x256xf32>
    %c0_1 = arith.constant 0 : index
    %c0_2 = arith.constant 0 : index
    %1 = vector.load %arg2[%c0_1, %c0_2] : memref<10x1xf32, #tpu.memory_space<vmem>>, vector<10x1xf32>
    %2 = vector.broadcast %1 : vector<10x1xf32> to vector<10x256xf32>
    %3 = vector.broadcast %0 : vector<1x256xf32> to vector<10x256xf32>
    %4 = arith.mulf %2, %3 : vector<10x256xf32>
    %c0_3 = arith.constant 0 : index
    %c0_4 = arith.constant 0 : index
    %5 = vector.load %arg3[%c0_3, %c0_4] : memref<10x1xf32, #tpu.memory_space<vmem>>, vector<10x1xf32>
    %6 = vector.broadcast %5 : vector<10x1xf32> to vector<10x256xf32>
    %7 = arith.addf %4, %6 : vector<10x256xf32>
    %cst = arith.constant 0.000000e+00 : f32
    %8 = vector.broadcast %cst : f32 to vector<10x256xf32>
    %9 = arith.maximumf %7, %8 : vector<10x256xf32>
    %c0_5 = arith.constant 0 : index
    %c0_6 = arith.constant 0 : index
    %10 = vector.load %arg6[%c0_5, %c0_6] : memref<50x1xf32, #tpu.memory_space<vmem>>, vector<50x1xf32>
    %11 = vector.broadcast %10 : vector<50x1xf32> to vector<50x256xf32>
    %12 = vector.broadcast %0 : vector<1x256xf32> to vector<50x256xf32>
    %13 = arith.mulf %11, %12 : vector<50x256xf32>
    %c0_7 = arith.constant 0 : index
    %c0_8 = arith.constant 0 : index
    %14 = vector.load %arg7[%c0_7, %c0_8] : memref<50x1xf32, #tpu.memory_space<vmem>>, vector<50x1xf32>
    %15 = vector.broadcast %14 : vector<50x1xf32> to vector<50x256xf32>
    %16 = arith.addf %13, %15 : vector<50x256xf32>
    %cst_9 = arith.constant 0.000000e+00 : f32
    %17 = vector.broadcast %cst_9 : f32 to vector<50x256xf32>
    %18 = arith.maximumf %16, %17 : vector<50x256xf32>
    %c0_10 = arith.constant 0 : index
    %c0_11 = arith.constant 0 : index
    %19 = vector.load %arg4[%c0_10, %c0_11] : memref<5x10xf32, #tpu.memory_space<vmem>>, vector<5x10xf32>
    %cst_12 = arith.constant dense<0.000000e+00> : vector<5x256xf32>
    %20 = tpu.matmul %19, %9, %cst_12 {dimension_numbers = #tpu.dot_dimension_numbers<[1], [0], [0], [1], [0, 0, 1, 1], [], []>} : vector<5x10xf32>, vector<10x256xf32>, vector<5x256xf32> -> vector<5x256xf32>
    %c0_13 = arith.constant 0 : index
    %c0_14 = arith.constant 0 : index
    %21 = vector.load %arg5[%c0_13, %c0_14] : memref<5x1xf32, #tpu.memory_space<vmem>>, vector<5x1xf32>
    %22 = vector.broadcast %21 : vector<5x1xf32> to vector<5x256xf32>
    %23 = arith.addf %20, %22 : vector<5x256xf32>
    %cst_15 = arith.constant dense<0xFF800000> : vector<256xf32>
    %24 = vector.multi_reduction <maximumf>, %23, %cst_15 [0] : vector<5x256xf32> to vector<256xf32>
    %25 = vector.shape_cast %24 : vector<256xf32> to vector<1x256xf32>
    %26 = vector.broadcast %25 : vector<1x256xf32> to vector<5x256xf32>
    %27 = arith.subf %23, %26 : vector<5x256xf32>
    %28 = math.exp %27 : vector<5x256xf32>
    %cst_16 = arith.constant dense<0.000000e+00> : vector<256xf32>
    %29 = vector.multi_reduction <add>, %28, %cst_16 [0] : vector<5x256xf32> to vector<256xf32>
    %30 = vector.shape_cast %29 : vector<256xf32> to vector<1x256xf32>
    %31 = tpu.reciprocal %30 : vector<1x256xf32> -> vector<1x256xf32>
    %32 = vector.broadcast %31 : vector<1x256xf32> to vector<5x256xf32>
    %33 = arith.mulf %28, %32 : vector<5x256xf32>
    %c0_17 = arith.constant 0 : index
    %c0_18 = arith.constant 0 : index
    %34 = vector.load %arg8[%c0_17, %c0_18] : memref<100x50xf32, #tpu.memory_space<vmem>>, vector<100x50xf32>
    %cst_19 = arith.constant dense<0.000000e+00> : vector<100x256xf32>
    %35 = tpu.matmul %34, %18, %cst_19 {dimension_numbers = #tpu.dot_dimension_numbers<[1], [0], [0], [1], [0, 0, 1, 1], [], []>} : vector<100x50xf32>, vector<50x256xf32>, vector<100x256xf32> -> vector<100x256xf32>
    %c0_20 = arith.constant 0 : index
    %c0_21 = arith.constant 0 : index
    %36 = vector.load %arg9[%c0_20, %c0_21] : memref<100x1xf32, #tpu.memory_space<vmem>>, vector<100x1xf32>
    %37 = vector.broadcast %36 : vector<100x1xf32> to vector<100x256xf32>
    %38 = arith.addf %35, %37 : vector<100x256xf32>
    %cst_22 = arith.constant 0.000000e+00 : f32
    %39 = vector.broadcast %cst_22 : f32 to vector<100x256xf32>
    %40 = arith.maximumf %38, %39 : vector<100x256xf32>
    %c0_23 = arith.constant 0 : index
    %c0_24 = arith.constant 0 : index
    %41 = vector.load %arg10[%c0_23, %c0_24] : memref<5x100xf32, #tpu.memory_space<vmem>>, vector<5x100xf32>
    %cst_25 = arith.constant dense<0.000000e+00> : vector<5x256xf32>
    %42 = tpu.matmul %41, %40, %cst_25 {dimension_numbers = #tpu.dot_dimension_numbers<[1], [0], [0], [1], [0, 0, 1, 1], [], []>} : vector<5x100xf32>, vector<100x256xf32>, vector<5x256xf32> -> vector<5x256xf32>
    %c0_26 = arith.constant 0 : index
    %c0_27 = arith.constant 0 : index
    %43 = vector.load %arg11[%c0_26, %c0_27] : memref<5x1xf32, #tpu.memory_space<vmem>>, vector<5x1xf32>
    %44 = vector.broadcast %43 : vector<5x1xf32> to vector<5x256xf32>
    %45 = arith.addf %42, %44 : vector<5x256xf32>
    %46 = arith.mulf %33, %45 : vector<5x256xf32>
    %cst_28 = arith.constant dense<0.000000e+00> : vector<256xf32>
    %47 = vector.multi_reduction <add>, %46, %cst_28 [0] : vector<5x256xf32> to vector<256xf32>
    %48 = vector.shape_cast %47 : vector<256xf32> to vector<1x256xf32>
    %c0_29 = arith.constant 0 : index
    %c0_30 = arith.constant 0 : index
    %49 = vector.load %arg12[%c0_29, %c0_30] : memref<1x256xf32, #tpu.memory_space<vmem>>, vector<1x256xf32>
    tpu.vector_store %arg12[%c0_29, %c0_30], %48 {strides = array<i32>} : memref<1x256xf32, #tpu.memory_space<vmem>>, vector<1x256xf32>,
    return
  }
  func.func @transform_0(%arg0: i32) -> (i32, i32) {
    %c0_i32 = arith.constant 0 : i32
    %c0_i32_0 = arith.constant 0 : i32
    return %c0_i32, %arg0 : i32, i32
  }
  func.func @transform_1(%arg0: i32) -> (i32, i32) {
    %c0_i32 = arith.constant 0 : i32
    %c0_i32_0 = arith.constant 0 : i32
    %c0_i32_1 = arith.constant 0 : i32
    return %c0_i32, %c0_i32_0 : i32, i32
  }
  func.func @transform_2(%arg0: i32) -> (i32, i32) {
    %c0_i32 = arith.constant 0 : i32
    %c0_i32_0 = arith.constant 0 : i32
    %c0_i32_1 = arith.constant 0 : i32
    return %c0_i32, %c0_i32_0 : i32, i32
  }
  func.func @transform_3(%arg0: i32) -> (i32, i32) {
    %c0_i32 = arith.constant 0 : i32
    %c0_i32_0 = arith.constant 0 : i32
    %c0_i32_1 = arith.constant 0 : i32
    return %c0_i32, %c0_i32_0 : i32, i32
  }
  func.func @transform_4(%arg0: i32) -> (i32, i32) {
    %c0_i32 = arith.constant 0 : i32
    %c0_i32_0 = arith.constant 0 : i32
    %c0_i32_1 = arith.constant 0 : i32
    return %c0_i32, %c0_i32_0 : i32, i32
  }
  func.func @transform_5(%arg0: i32) -> (i32, i32) {
    %c0_i32 = arith.constant 0 : i32
    %c0_i32_0 = arith.constant 0 : i32
    %c0_i32_1 = arith.constant 0 : i32
    return %c0_i32, %c0_i32_0 : i32, i32
  }
  func.func @transform_6(%arg0: i32) -> (i32, i32) {
    %c0_i32 = arith.constant 0 : i32
    %c0_i32_0 = arith.constant 0 : i32
    %c0_i32_1 = arith.constant 0 : i32
    return %c0_i32, %c0_i32_0 : i32, i32
  }
  func.func @transform_7(%arg0: i32) -> (i32, i32) {
    %c0_i32 = arith.constant 0 : i32
    %c0_i32_0 = arith.constant 0 : i32
    %c0_i32_1 = arith.constant 0 : i32
    return %c0_i32, %c0_i32_0 : i32, i32
  }
  func.func @transform_8(%arg0: i32) -> (i32, i32) {
    %c0_i32 = arith.constant 0 : i32
    %c0_i32_0 = arith.constant 0 : i32
    %c0_i32_1 = arith.constant 0 : i32
    return %c0_i32, %c0_i32_0 : i32, i32
  }
  func.func @transform_9(%arg0: i32) -> (i32, i32) {
    %c0_i32 = arith.constant 0 : i32
    %c0_i32_0 = arith.constant 0 : i32
    %c0_i32_1 = arith.constant 0 : i32
    return %c0_i32, %c0_i32_0 : i32, i32
  }
  func.func @transform_10(%arg0: i32) -> (i32, i32) {
    %c0_i32 = arith.constant 0 : i32
    %c0_i32_0 = arith.constant 0 : i32
    %c0_i32_1 = arith.constant 0 : i32
    return %c0_i32, %c0_i32_0 : i32, i32
  }
  func.func @transform_11(%arg0: i32) -> (i32, i32) {
    %c0_i32 = arith.constant 0 : i32
    %c0_i32_0 = arith.constant 0 : i32
    return %c0_i32, %arg0 : i32, i32
  }
}

</mosaic_0001>

<llo_original>
// kernel: tpu_custom_call.1
$region0: #{tpu_custom_call.1}
  #allocation0 [shape = 'u32[]', space=smem, size = 0x4, offset = 0x4, fixed_abs, tag = 'smem constant byte address 0x4 - core index']
  #allocation1 [shape = 'u32[72,128]{1,0:T(1,128)}', space=vmem, size = 0x9000, scoped, tag = 'internal scratch']
  %s0 = inlined_call_operand.vmem [shape: f32[1,512], index: 0, kind: input, shape index: {}]
  %s1 = inlined_call_operand.vmem [shape: f32[10,1], index: 1, kind: input, shape index: {}]
  %s2 = inlined_call_operand.vmem [shape: f32[10,1], index: 2, kind: input, shape index: {}]
  %s3 = inlined_call_operand.vmem [shape: f32[5,10], index: 3, kind: input, shape index: {}]
  %s4 = inlined_call_operand.vmem [shape: f32[5,1], index: 4, kind: input, shape index: {}]
  %s5 = inlined_call_operand.vmem [shape: f32[50,1], index: 5, kind: input, shape index: {}]
  %s6 = inlined_call_operand.vmem [shape: f32[50,1], index: 6, kind: input, shape index: {}]
  %s7 = inlined_call_operand.vmem [shape: f32[100,50], index: 7, kind: input, shape index: {}]
  %s8 = inlined_call_operand.vmem [shape: f32[100,1], index: 8, kind: input, shape index: {}]
  %s9 = inlined_call_operand.vmem [shape: f32[5,100], index: 9, kind: input, shape index: {}]
  %s10 = inlined_call_operand.vmem [shape: f32[5,1], index: 10, kind: input, shape index: {}]
  %s11 = inlined_call_operand.hbm [shape: f32[1,512], index: 11, kind: output, shape index: {}]
  %s12 = sld [smem:[#allocation0]]
  $region77: #{tpu_custom_call.1} parent=0
    _
  %s14 = ssub.s32 1, %s12
  %s15 = scalar_select 0, %s14, %s12
  $region1: #{tpu_custom_call.1} parent=0
    #allocation2 [shape = 'u8[2048]{0}', space=vmem, size = 0x800, scoped, tag = 'output window, operand 0']
    #allocation3 [shape = 's32[2]{0}', space=sflag, size = 0x8, scoped, tag = 'scoped memory for tpu_custom_call.1']
    %16 = vsyncpa [#allocation3], 0
    %s17 = scalar_lea.sflag [#allocation3], 1
    %18 = vsyncpa %s17, 0
    loop: start=0, step=1, limit=4
    $region2: #{tpu_custom_call.1} parent=1 // loop_pre_header
      _
    $region3: #{tpu_custom_call.1} parent=1 // loop_header
      %s20 = sphi 0, %s24
      %p21 = scmp.ge.s32.totalorder %s20, 4
      %s30 = sphi 0, %s32
      %s33 = sphi 0, %s30
      %s34 = sphi 0, %s33
      %s50 = sphi 0, %s34
      %s54 = sphi 0, %s54
      %s56 = sphi 0, %s54
      %s57 = sphi 0, %s56
      %s71 = sphi 0, %s57
      %s75 = sphi 0, %s75
      %s77 = sphi 0, %s75
      %s78 = sphi 0, %s77
      %s92 = sphi 0, %s78
      %s96 = sphi 0, %s96
      %s98 = sphi 0, %s96
      %s99 = sphi 0, %s98
      %s113 = sphi 0, %s99
      %s117 = sphi 0, %s117
      %s119 = sphi 0, %s117
      %s120 = sphi 0, %s119
      %s134 = sphi 0, %s120
      %s138 = sphi 0, %s138
      %s140 = sphi 0, %s138
      %s141 = sphi 0, %s140
      %s155 = sphi 0, %s141
      %s159 = sphi 0, %s159
      %s161 = sphi 0, %s159
      %s162 = sphi 0, %s161
      %s176 = sphi 0, %s162
      %s180 = sphi 0, %s180
      %s182 = sphi 0, %s180
      %s183 = sphi 0, %s182
      %s197 = sphi 0, %s183
      %s201 = sphi 0, %s201
      %s203 = sphi 0, %s201
      %s204 = sphi 0, %s203
      %s218 = sphi 0, %s204
      %s222 = sphi 0, %s222
      %s224 = sphi 0, %s222
      %s225 = sphi 0, %s224
      %s239 = sphi 0, %s225
      %s243 = sphi 0, %s243
      %s245 = sphi 0, %s243
      %s246 = sphi 0, %s245
      %s260 = sphi 0, %s246
      %s266 = sphi 0, %s268
      %s269 = sphi 0, %s266
      %s270 = sphi 0, %s269
      %s286 = sphi 0, %s270
    $region4: #{tpu_custom_call.1} parent=1 // loop_header_branch
      %23 = sbr.rel (%p21) target = $region8
    $region5: #{tpu_custom_call.1} parent=1 // loop_body
      %s25 = ssub.s32 %s20, 1
      %s26 = ssub.s32 %s20, 2
      %s27 = sadd.s32 %s20, 1
      %s28 = ssub.s32 %s20, %s27
      %p29 = scmp.eq.s32.totalorder %s28, 0
      %s31 = sadd.s32 %s30, 1
      %s32 = scalar_select %p29, %s30, %s31
      %p35 = pneg %p29
      %p36 = scmp.eq.s32.totalorder %s20, 1
      %p37 = por %p35, %p36
      %p38 = scmp.ne.s32.totalorder %s30, %s33
      %p39 = scmp.eq.s32.totalorder %s20, 0
      %p40 = por %p38, %p39
      %p41 = scmp.ne.s32.totalorder %s30, %s33
      %p42 = scmp.eq.s32.totalorder %s25, 1
      %p43 = por %p41, %p42
      %p44 = scmp.ne.s32.totalorder %s33, %s34
      %p45 = scmp.eq.s32.totalorder %s25, 0
      %p46 = por %p44, %p45
      %p47 = scmp.ne.s32.totalorder %s33, %s34
      %p48 = scmp.eq.s32.totalorder %s26, 1
      %p49 = por %p47, %p48
      %p51 = scmp.ne.s32.totalorder %s34, %s50
      %p52 = scmp.eq.s32.totalorder %s26, 0
      %p53 = por %p51, %p52
      %s55 = sadd.s32 %s54, 1
      %p58 = scmp.eq.s32.totalorder %s20, 1
      %p59 = scmp.ne.s32.totalorder %s54, %s56
      %p60 = scmp.eq.s32.totalorder %s20, 0
      %p61 = por %p59, %p60
      %p62 = scmp.ne.s32.totalorder %s54, %s56
      %p63 = scmp.eq.s32.totalorder %s25, 1
      %p64 = por %p62, %p63
      %p65 = scmp.ne.s32.totalorder %s56, %s57
      %p66 = scmp.eq.s32.totalorder %s25, 0
      %p67 = por %p65, %p66
      %p68 = scmp.ne.s32.totalorder %s56, %s57
      %p69 = scmp.eq.s32.totalorder %s26, 1
      %p70 = por %p68, %p69
      %p72 = scmp.ne.s32.totalorder %s57, %s71
      %p73 = scmp.eq.s32.totalorder %s26, 0
      %p74 = por %p72, %p73
      %s76 = sadd.s32 %s75, 1
      %p79 = scmp.eq.s32.totalorder %s20, 1
      %p80 = scmp.ne.s32.totalorder %s75, %s77
      %p81 = scmp.eq.s32.totalorder %s20, 0
      %p82 = por %p80, %p81
      %p83 = scmp.ne.s32.totalorder %s75, %s77
      %p84 = scmp.eq.s32.totalorder %s25, 1
      %p85 = por %p83, %p84
      %p86 = scmp.ne.s32.totalorder %s77, %s78
      %p87 = scmp.eq.s32.totalorder %s25, 0
      %p88 = por %p86, %p87
      %p89 = scmp.ne.s32.totalorder %s77, %s78
      %p90 = scmp.eq.s32.totalorder %s26, 1
      %p91 = por %p89, %p90
      %p93 = scmp.ne.s32.totalorder %s78, %s92
      %p94 = scmp.eq.s32.totalorder %s26, 0
      %p95 = por %p93, %p94
      %s97 = sadd.s32 %s96, 1
      %p100 = scmp.eq.s32.totalorder %s20, 1
      %p101 = scmp.ne.s32.totalorder %s96, %s98
      %p102 = scmp.eq.s32.totalorder %s20, 0
      %p103 = por %p101, %p102
      %p104 = scmp.ne.s32.totalorder %s96, %s98
      %p105 = scmp.eq.s32.totalorder %s25, 1
      %p106 = por %p104, %p105
      %p107 = scmp.ne.s32.totalorder %s98, %s99
      %p108 = scmp.eq.s32.totalorder %s25, 0
      %p109 = por %p107, %p108
      %p110 = scmp.ne.s32.totalorder %s98, %s99
      %p111 = scmp.eq.s32.totalorder %s26, 1
      %p112 = por %p110, %p111
      %p114 = scmp.ne.s32.totalorder %s99, %s113
      %p115 = scmp.eq.s32.totalorder %s26, 0
      %p116 = por %p114, %p115
      %s118 = sadd.s32 %s117, 1
      %p121 = scmp.eq.s32.totalorder %s20, 1
      %p122 = scmp.ne.s32.totalorder %s117, %s119
      %p123 = scmp.eq.s32.totalorder %s20, 0
      %p124 = por %p122, %p123
      %p125 = scmp.ne.s32.totalorder %s117, %s119
      %p126 = scmp.eq.s32.totalorder %s25, 1
      %p127 = por %p125, %p126
      %p128 = scmp.ne.s32.totalorder %s119, %s120
      %p129 = scmp.eq.s32.totalorder %s25, 0
      %p130 = por %p128, %p129
      %p131 = scmp.ne.s32.totalorder %s119, %s120
      %p132 = scmp.eq.s32.totalorder %s26, 1
      %p133 = por %p131, %p132
      %p135 = scmp.ne.s32.totalorder %s120, %s134
      %p136 = scmp.eq.s32.totalorder %s26, 0
      %p137 = por %p135, %p136
      %s139 = sadd.s32 %s138, 1
      %p142 = scmp.eq.s32.totalorder %s20, 1
      %p143 = scmp.ne.s32.totalorder %s138, %s140
      %p144 = scmp.eq.s32.totalorder %s20, 0
      %p145 = por %p143, %p144
      %p146 = scmp.ne.s32.totalorder %s138, %s140
      %p147 = scmp.eq.s32.totalorder %s25, 1
      %p148 = por %p146, %p147
      %p149 = scmp.ne.s32.totalorder %s140, %s141
      %p150 = scmp.eq.s32.totalorder %s25, 0
      %p151 = por %p149, %p150
      %p152 = scmp.ne.s32.totalorder %s140, %s141
      %p153 = scmp.eq.s32.totalorder %s26, 1
      %p154 = por %p152, %p153
      %p156 = scmp.ne.s32.totalorder %s141, %s155
      %p157 = scmp.eq.s32.totalorder %s26, 0
      %p158 = por %p156, %p157
      %s160 = sadd.s32 %s159, 1
      %p163 = scmp.eq.s32.totalorder %s20, 1
      %p164 = scmp.ne.s32.totalorder %s159, %s161
      %p165 = scmp.eq.s32.totalorder %s20, 0
      %p166 = por %p164, %p165
      %p167 = scmp.ne.s32.totalorder %s159, %s161
      %p168 = scmp.eq.s32.totalorder %s25, 1
      %p169 = por %p167, %p168
      %p170 = scmp.ne.s32.totalorder %s161, %s162
      %p171 = scmp.eq.s32.totalorder %s25, 0
      %p172 = por %p170, %p171
      %p173 = scmp.ne.s32.totalorder %s161, %s162
      %p174 = scmp.eq.s32.totalorder %s26, 1
      %p175 = por %p173, %p174
      %p177 = scmp.ne.s32.totalorder %s162, %s176
      %p178 = scmp.eq.s32.totalorder %s26, 0
      %p179 = por %p177, %p178
      %s181 = sadd.s32 %s180, 1
      %p184 = scmp.eq.s32.totalorder %s20, 1
      %p185 = scmp.ne.s32.totalorder %s180, %s182
      %p186 = scmp.eq.s32.totalorder %s20, 0
      %p187 = por %p185, %p186
      %p188 = scmp.ne.s32.totalorder %s180, %s182
      %p189 = scmp.eq.s32.totalorder %s25, 1
      %p190 = por %p188, %p189
      %p191 = scmp.ne.s32.totalorder %s182, %s183
      %p192 = scmp.eq.s32.totalorder %s25, 0
      %p193 = por %p191, %p192
      %p194 = scmp.ne.s32.totalorder %s182, %s183
      %p195 = scmp.eq.s32.totalorder %s26, 1
      %p196 = por %p194, %p195
      %p198 = scmp.ne.s32.totalorder %s183, %s197
      %p199 = scmp.eq.s32.totalorder %s26, 0
      %p200 = por %p198, %p199
      %s202 = sadd.s32 %s201, 1
      %p205 = scmp.eq.s32.totalorder %s20, 1
      %p206 = scmp.ne.s32.totalorder %s201, %s203
      %p207 = scmp.eq.s32.totalorder %s20, 0
      %p208 = por %p206, %p207
      %p209 = scmp.ne.s32.totalorder %s201, %s203
      %p210 = scmp.eq.s32.totalorder %s25, 1
      %p211 = por %p209, %p210
      %p212 = scmp.ne.s32.totalorder %s203, %s204
      %p213 = scmp.eq.s32.totalorder %s25, 0
      %p214 = por %p212, %p213
      %p215 = scmp.ne.s32.totalorder %s203, %s204
      %p216 = scmp.eq.s32.totalorder %s26, 1
      %p217 = por %p215, %p216
      %p219 = scmp.ne.s32.totalorder %s204, %s218
      %p220 = scmp.eq.s32.totalorder %s26, 0
      %p221 = por %p219, %p220
      %s223 = sadd.s32 %s222, 1
      %p226 = scmp.eq.s32.totalorder %s20, 1
      %p227 = scmp.ne.s32.totalorder %s222, %s224
      %p228 = scmp.eq.s32.totalorder %s20, 0
      %p229 = por %p227, %p228
      %p230 = scmp.ne.s32.totalorder %s222, %s224
      %p231 = scmp.eq.s32.totalorder %s25, 1
      %p232 = por %p230, %p231
      %p233 = scmp.ne.s32.totalorder %s224, %s225
      %p234 = scmp.eq.s32.totalorder %s25, 0
      %p235 = por %p233, %p234
      %p236 = scmp.ne.s32.totalorder %s224, %s225
      %p237 = scmp.eq.s32.totalorder %s26, 1
      %p238 = por %p236, %p237
      %p240 = scmp.ne.s32.totalorder %s225, %s239
      %p241 = scmp.eq.s32.totalorder %s26, 0
      %p242 = por %p240, %p241
      %s244 = sadd.s32 %s243, 1
      %p247 = scmp.eq.s32.totalorder %s20, 1
      %p248 = scmp.ne.s32.totalorder %s243, %s245
      %p249 = scmp.eq.s32.totalorder %s20, 0
      %p250 = por %p248, %p249
      %p251 = scmp.ne.s32.totalorder %s243, %s245
      %p252 = scmp.eq.s32.totalorder %s25, 1
      %p253 = por %p251, %p252
      %p254 = scmp.ne.s32.totalorder %s245, %s246
      %p255 = scmp.eq.s32.totalorder %s25, 0
      %p256 = por %p254, %p255
      %p257 = scmp.ne.s32.totalorder %s245, %s246
      %p258 = scmp.eq.s32.totalorder %s26, 1
      %p259 = por %p257, %p258
      %p261 = scmp.ne.s32.totalorder %s246, %s260
      %p262 = scmp.eq.s32.totalorder %s26, 0
      %p263 = por %p261, %p262
      %s264 = ssub.s32 %s20, %s27
      %p265 = scmp.eq.s32.totalorder %s264, 0
      %s267 = sadd.s32 %s266, 1
      %s268 = scalar_select %p265, %s266, %s267
      %p271 = pneg %p265
      %p272 = scmp.eq.s32.totalorder %s20, 1
      %p273 = por %p271, %p272
      %p274 = scmp.ne.s32.totalorder %s266, %s269
      %p275 = scmp.eq.s32.totalorder %s20, 0
      %p276 = por %p274, %p275
      %p277 = scmp.ne.s32.totalorder %s266, %s269
      %p278 = scmp.eq.s32.totalorder %s25, 1
      %p279 = por %p277, %p278
      %p280 = scmp.ne.s32.totalorder %s269, %s270
      %p281 = scmp.eq.s32.totalorder %s25, 0
      %p282 = por %p280, %p281
      %p283 = scmp.ne.s32.totalorder %s269, %s270
      %p284 = scmp.eq.s32.totalorder %s26, 1
      %p285 = por %p283, %p284
      %p287 = scmp.ne.s32.totalorder %s270, %s286
      %p288 = scmp.eq.s32.totalorder %s26, 0
      %p289 = por %p287, %p288
      %p290 = scmp.le.s32.totalorder 1, %s20
      %p291 = scmp.lt.s32.totalorder %s20, 3
      %p292 = pnand %p290, %p291
      %p293 = pneg %p292
      // Predicated region
      $region9: #{tpu_custom_call.1} parent=5 // pred_check
        _
      $region10: #{tpu_custom_call.1} parent=5 // pred_check_branch
        %295 = sbr.rel (%p292) target = $region12
      $region11: #{tpu_custom_call.1} parent=5 // pred_region
        %s296 = ssub.s32 %s20, 1
        // Predicated region
        $region13: #{tpu_custom_call.1} parent=11 // pred_check
          %p297 = pneg %p67
        $region14: #{tpu_custom_call.1} parent=11 // pred_check_branch
          %299 = sbr.rel (%p297) target = $region16
        $region15: #{tpu_custom_call.1} parent=11 // pred_region
          _
        $region16: #{tpu_custom_call.1} parent=11 // pred_fallthru
          _
        // Predicated region
        $region17: #{tpu_custom_call.1} parent=11 // pred_check
          %p300 = pneg %p88
        $region18: #{tpu_custom_call.1} parent=11 // pred_check_branch
          %302 = sbr.rel (%p300) target = $region20
        $region19: #{tpu_custom_call.1} parent=11 // pred_region
          _
        $region20: #{tpu_custom_call.1} parent=11 // pred_fallthru
          _
        // Predicated region
        $region21: #{tpu_custom_call.1} parent=11 // pred_check
          %p303 = pneg %p109
        $region22: #{tpu_custom_call.1} parent=11 // pred_check_branch
          %305 = sbr.rel (%p303) target = $region24
        $region23: #{tpu_custom_call.1} parent=11 // pred_region
          _
        $region24: #{tpu_custom_call.1} parent=11 // pred_fallthru
          _
        // Predicated region
        $region25: #{tpu_custom_call.1} parent=11 // pred_check
          %p306 = pneg %p130
        $region26: #{tpu_custom_call.1} parent=11 // pred_check_branch
          %308 = sbr.rel (%p306) target = $region28
        $region27: #{tpu_custom_call.1} parent=11 // pred_region
          _
        $region28: #{tpu_custom_call.1} parent=11 // pred_fallthru
          _
        // Predicated region
        $region29: #{tpu_custom_call.1} parent=11 // pred_check
          %p309 = pneg %p151
        $region30: #{tpu_custom_call.1} parent=11 // pred_check_branch
          %311 = sbr.rel (%p309) target = $region32
        $region31: #{tpu_custom_call.1} parent=11 // pred_region
          _
        $region32: #{tpu_custom_call.1} parent=11 // pred_fallthru
          _
        // Predicated region
        $region33: #{tpu_custom_call.1} parent=11 // pred_check
          %p312 = pneg %p172
        $region34: #{tpu_custom_call.1} parent=11 // pred_check_branch
          %314 = sbr.rel (%p312) target = $region36
        $region35: #{tpu_custom_call.1} parent=11 // pred_region
          _
        $region36: #{tpu_custom_call.1} parent=11 // pred_fallthru
          _
        // Predicated region
        $region37: #{tpu_custom_call.1} parent=11 // pred_check
          %p315 = pneg %p193
        $region38: #{tpu_custom_call.1} parent=11 // pred_check_branch
          %317 = sbr.rel (%p315) target = $region40
        $region39: #{tpu_custom_call.1} parent=11 // pred_region
          _
        $region40: #{tpu_custom_call.1} parent=11 // pred_fallthru
          _
        // Predicated region
        $region41: #{tpu_custom_call.1} parent=11 // pred_check
          %p318 = pneg %p214
        $region42: #{tpu_custom_call.1} parent=11 // pred_check_branch
          %320 = sbr.rel (%p318) target = $region44
        $region43: #{tpu_custom_call.1} parent=11 // pred_region
          _
        $region44: #{tpu_custom_call.1} parent=11 // pred_fallthru
          _
        // Predicated region
        $region45: #{tpu_custom_call.1} parent=11 // pred_check
          %p321 = pneg %p235
        $region46: #{tpu_custom_call.1} parent=11 // pred_check_branch
          %323 = sbr.rel (%p321) target = $region48
        $region47: #{tpu_custom_call.1} parent=11 // pred_region
          _
        $region48: #{tpu_custom_call.1} parent=11 // pred_fallthru
          _
        // Predicated region
        $region49: #{tpu_custom_call.1} parent=11 // pred_check
          %p324 = pneg %p256
        $region50: #{tpu_custom_call.1} parent=11 // pred_check_branch
          %326 = sbr.rel (%p324) target = $region52
        $region51: #{tpu_custom_call.1} parent=11 // pred_region
          _
        $region52: #{tpu_custom_call.1} parent=11 // pred_fallthru
          _
      $region12: #{tpu_custom_call.1} parent=5 // pred_fallthru
        _
      %p327 = scmp.lt.s32.totalorder %s20, 2
      // Predicated region
      $region53: #{tpu_custom_call.1} parent=5 // pred_check
        %p328 = pneg %p327
      $region54: #{tpu_custom_call.1} parent=5 // pred_check_branch
        %330 = sbr.rel (%p328) target = $region56
      $region55: #{tpu_custom_call.1} parent=5 // pred_region
        // Predicated region
        $region57: #{tpu_custom_call.1} parent=55 // pred_check
          %p331 = pneg %p40
        $region58: #{tpu_custom_call.1} parent=55 // pred_check_branch
          %333 = sbr.rel (%p331) target = $region60
        $region59: #{tpu_custom_call.1} parent=55 // pred_region
          %s334 = smul.u32 2, %s20
          %p335 = scmp.lt.s32.totalorder %s334, 3
          %s336 = scalar_select %p335, %s334, 3
          %s337 = scalar_lea.vmem %s0, %s336
          %s338 = smul.u32 2, %s20
        $region60: #{tpu_custom_call.1} parent=55 // pred_fallthru
          _
      $region56: #{tpu_custom_call.1} parent=5 // pred_fallthru
        _
      %p339 = scmp.le.s32.totalorder 1, %s20
      %p340 = scmp.lt.s32.totalorder %s20, 3
      %p341 = pnand %p339, %p340
      %p342 = pneg %p341
      // Predicated region
      $region61: #{tpu_custom_call.1} parent=5 // pred_check
        _
      $region62: #{tpu_custom_call.1} parent=5 // pred_check_branch
        %344 = sbr.rel (%p341) target = $region64
      $region63: #{tpu_custom_call.1} parent=5 // pred_region
        %s345 = ssub.s32 %s20, 1
        %s346 = smul.u32 2, %s25
        %p347 = scmp.lt.s32.totalorder %s346, 3
        %s348 = scalar_select %p347, %s346, 3
        %s349 = scalar_lea.vmem %s0, %s348
        %p350 = pneg %p46
        %p351 = pneg %p43
        %p352 = pneg %p67
        %p353 = pneg %p64
        %p354 = pneg %p88
        %p355 = pneg %p85
        %p356 = pneg %p109
        %p357 = pneg %p106
        %p358 = pneg %p130
        %p359 = pneg %p127
        %p360 = pneg %p151
        %p361 = pneg %p148
        %p362 = pneg %p172
        %p363 = pneg %p169
        %p364 = pneg %p193
        %p365 = pneg %p190
        %p366 = pneg %p214
        %p367 = pneg %p211
        %p368 = pneg %p235
        %p369 = pneg %p232
        %p370 = pneg %p256
        %p371 = pneg %p253
        %p372 = pneg %p282
        %p373 = pneg %p279
        %s374 = sand.u32 %s269, 1
        %s375 = scalar_lea.sflag [#allocation3], %s374
        %s376 = sand.u32 %s269, 1
        %s377 = smul.addr %s376, 2
        %s378 = scalar_lea.vmem [#allocation2], %s377
        %s379 = smul.u32 2, %s25
        %p380 = scmp.lt.s32.totalorder %s379, 3
        %s381 = scalar_select %p380, %s379, 3
        %s382 = scalar_lea.vmem %s0, %s381
        %s383 = smul.u32 2, %s25
        %s384 = smul.u32 2, %s25
        %v385 = vld [vmem:[%s382] sm:$0x3]
        %v386 = vld [vmem:[%s1] sm:$0xff]
        %v387 = vld [vmem:[%s1 + $0x8] sm:$0x3]
        %389 = vset.pattern.permute.xlu0 0
        %390 = vperm.xlu0 %389, %v386
        %v391 = vpop.permute.xlu0 %390
        %394 = vset.pattern.permute.xlu0 0
        %395 = vperm.xlu0 %394, %v387
        %v396 = vpop.permute.xlu0 %395
        %v399 = vperm.slane %v385, 0
        %v400 = vperm.slane %v385, 1
        %v403 = vmul.f32 %v391, %v399
        %v404 = vmul.f32 %v391, %v400
        %v405 = vmul.f32 %v396, %v399
        %v406 = vmul.f32 %v396, %v400
        %v407 = vld [vmem:[%s2] sm:$0xff]
        %v408 = vld [vmem:[%s2 + $0x8] sm:$0x3]
        %410 = vset.pattern.permute.xlu0 0
        %411 = vperm.xlu0 %410, %v407
        %v412 = vpop.permute.xlu0 %411
        %415 = vset.pattern.permute.xlu0 0
        %416 = vperm.xlu0 %415, %v408
        %v417 = vpop.permute.xlu0 %416
        %v419 = vadd.f32 %v403, %v412
        %v420 = vadd.f32 %v404, %v412
        %v421 = vadd.f32 %v405, %v417
        %v422 = vadd.f32 %v406, %v417
        %v423 = vmax.f32 %v419, 0.0
        %v424 = vmax.f32 %v420, 0.0
        %v425 = vmax.f32 %v421, 0.0
        %v426 = vmax.f32 %v422, 0.0
        %v427 = vld [vmem:[%s5] sm:$0xff]
        %v428 = vld [vmem:[%s5 + $0x8] sm:$0xff]
        %v429 = vld [vmem:[%s5 + $0x10] sm:$0xff]
        %v430 = vld [vmem:[%s5 + $0x18] sm:$0xff]
        %v431 = vld [vmem:[%s5 + $0x20] sm:$0xff]
        %v432 = vld [vmem:[%s5 + $0x28] sm:$0xff]
        %v433 = vld [vmem:[%s5 + $0x30] sm:$0x3]
        %435 = vset.pattern.permute.xlu0 0
        %436 = vperm.xlu0 %435, %v427
        %v437 = vpop.permute.xlu0 %436
        %440 = vset.pattern.permute.xlu0 0
        %441 = vperm.xlu0 %440, %v428
        %v442 = vpop.permute.xlu0 %441
        %445 = vset.pattern.permute.xlu0 0
        %446 = vperm.xlu0 %445, %v429
        %v447 = vpop.permute.xlu0 %446
        %450 = vset.pattern.permute.xlu0 0
        %451 = vperm.xlu0 %450, %v430
        %v452 = vpop.permute.xlu0 %451
        %455 = vset.pattern.permute.xlu0 0
        %456 = vperm.xlu0 %455, %v431
        %v457 = vpop.permute.xlu0 %456
        %460 = vset.pattern.permute.xlu0 0
        %461 = vperm.xlu0 %460, %v432
        %v462 = vpop.permute.xlu0 %461
        %465 = vset.pattern.permute.xlu0 0
        %466 = vperm.xlu0 %465, %v433
        %v467 = vpop.permute.xlu0 %466
        %v469 = vmul.f32 %v437, %v399
        %v470 = vmul.f32 %v437, %v400
        %v471 = vmul.f32 %v442, %v399
        %v472 = vmul.f32 %v442, %v400
        %v473 = vmul.f32 %v447, %v399
        %v474 = vmul.f32 %v447, %v400
        %v475 = vmul.f32 %v452, %v399
        %v476 = vmul.f32 %v452, %v400
        %v477 = vmul.f32 %v457, %v399
        %v478 = vmul.f32 %v457, %v400
        %v479 = vmul.f32 %v462, %v399
        %v480 = vmul.f32 %v462, %v400
        %v481 = vmul.f32 %v467, %v399
        %v482 = vmul.f32 %v467, %v400
        %v483 = vld [vmem:[%s6] sm:$0xff]
        %v484 = vld [vmem:[%s6 + $0x8] sm:$0xff]
        %v485 = vld [vmem:[%s6 + $0x10] sm:$0xff]
        %v486 = vld [vmem:[%s6 + $0x18] sm:$0xff]
        %v487 = vld [vmem:[%s6 + $0x20] sm:$0xff]
        %v488 = vld [vmem:[%s6 + $0x28] sm:$0xff]
        %v489 = vld [vmem:[%s6 + $0x30] sm:$0x3]
        %491 = vset.pattern.permute.xlu0 0
        %492 = vperm.xlu0 %491, %v483
        %v493 = vpop.permute.xlu0 %492
        %496 = vset.pattern.permute.xlu0 0
        %497 = vperm.xlu0 %496, %v484
        %v498 = vpop.permute.xlu0 %497
        %501 = vset.pattern.permute.xlu0 0
        %502 = vperm.xlu0 %501, %v485
        %v503 = vpop.permute.xlu0 %502
        %506 = vset.pattern.permute.xlu0 0
        %507 = vperm.xlu0 %506, %v486
        %v508 = vpop.permute.xlu0 %507
        %511 = vset.pattern.permute.xlu0 0
        %512 = vperm.xlu0 %511, %v487
        %v513 = vpop.permute.xlu0 %512
        %516 = vset.pattern.permute.xlu0 0
        %517 = vperm.xlu0 %516, %v488
        %v518 = vpop.permute.xlu0 %517
        %521 = vset.pattern.permute.xlu0 0
        %522 = vperm.xlu0 %521, %v489
        %v523 = vpop.permute.xlu0 %522
        %v525 = vadd.f32 %v469, %v493
        %v526 = vadd.f32 %v470, %v493
        %v527 = vadd.f32 %v471, %v498
        %v528 = vadd.f32 %v472, %v498
        %v529 = vadd.f32 %v473, %v503
        %v530 = vadd.f32 %v474, %v503
        %v531 = vadd.f32 %v475, %v508
        %v532 = vadd.f32 %v476, %v508
        %v533 = vadd.f32 %v477, %v513
        %v534 = vadd.f32 %v478, %v513
        %v535 = vadd.f32 %v479, %v518
        %v536 = vadd.f32 %v480, %v518
        %v537 = vadd.f32 %v481, %v523
        %v538 = vadd.f32 %v482, %v523
        %v539 = vmax.f32 %v525, 0.0
        %v540 = vmax.f32 %v526, 0.0
        %v541 = vmax.f32 %v527, 0.0
        %v542 = vmax.f32 %v528, 0.0
        %v543 = vmax.f32 %v529, 0.0
        %v544 = vmax.f32 %v530, 0.0
        %v545 = vmax.f32 %v531, 0.0
        %v546 = vmax.f32 %v532, 0.0
        %v547 = vmax.f32 %v533, 0.0
        %v548 = vmax.f32 %v534, 0.0
        %v549 = vmax.f32 %v535, 0.0
        %v550 = vmax.f32 %v536, 0.0
        %v551 = vmax.f32 %v537, 0.0
        %v552 = vmax.f32 %v538, 0.0
        %v553 = vld [vmem:[%s3] sm:$0x1f]
        %v554 = vld [vmem:[%s4] sm:$0x1f]
        %556 = vset.pattern.permute.xlu0 0
        %557 = vperm.xlu0 %556, %v554
        %v558 = vpop.permute.xlu0 %557
        %vm560 = vcmask 80896
        %v562 = vsel %vm560, %v553, 0
        %vm564 = vcmask 1041408
        %v566 = vsel %vm564, %v425, 0
        %v569 = vsel %vm564, %v426, 0
        %571 = vmatpush.msra.mxu0 0.0
        %572 = vmatpush.msra.mxu0 0.0
        %573 = vmatpush.msra.mxu0 0.0
        %574 = vmatpush.msra.mxu0 0.0
        %575 = vmatpush.msra.mxu0 0.0
        %576 = vmatpush.msra.mxu0 0.0
        %577 = vmatpush.msra.mxu0 0.0
        %578 = vmatpush.msra.mxu0 0.0
        %579 = vmatpush.msra.mxu0 0.0
        %580 = vmatpush.msra.mxu0 0.0
        %581 = vmatpush.msra.mxu0 0.0
        %582 = vmatpush.msra.mxu0 0.0
        %583 = vmatpush.msra.mxu0 0.0
        %584 = vmatpush.msra.mxu0 0.0
        %585 = vmatpush.msra.mxu0 %v566
        %586 = vmatpush.msra.mxu0 %v423
        %587 = vmatmul.f32.gmra.mxu0 %v562
        %v588 = vpop.f32.mrf.mxu0
        %v589 = vadd.f32 %v558, %v588
        %590 = vdwg.mxu0
        %591 = vmatpush.msra.mxu0 0.0
        %592 = vmatpush.msra.mxu0 0.0
        %593 = vmatpush.msra.mxu0 0.0
        %594 = vmatpush.msra.mxu0 0.0
        %595 = vmatpush.msra.mxu0 0.0
        %596 = vmatpush.msra.mxu0 0.0
        %597 = vmatpush.msra.mxu0 0.0
        %598 = vmatpush.msra.mxu0 0.0
        %599 = vmatpush.msra.mxu0 0.0
        %600 = vmatpush.msra.mxu0 0.0
        %601 = vmatpush.msra.mxu0 0.0
        %602 = vmatpush.msra.mxu0 0.0
        %603 = vmatpush.msra.mxu0 0.0
        %604 = vmatpush.msra.mxu0 0.0
        %605 = vmatpush.msra.mxu0 %v569
        %606 = vmatpush.msra.mxu0 %v424
        %607 = vmatmul.f32.gmra.mxu0 %v562
        %v608 = vpop.f32.mrf.mxu0
        %v609 = vadd.f32 %v558, %v608
        %610 = vdwg.mxu0
        %vm611 = vcmask 1044480
        %v612 = vsel %vm611, %v589, -inf
        %v613 = vrot.slane %v612, 4
        %v614 = vmax.f32 %v612, %v613
        %v615 = vrot.slane %v614, 2
        %v616 = vmax.f32 %v614, %v615
        %v617 = vrot.slane %v616, 1
        %v618 = vmax.f32 %v616, %v617
        %v619 = vsel %vm611, %v609, -inf
        %v620 = vrot.slane %v619, 4
        %v621 = vmax.f32 %v619, %v620
        %v622 = vrot.slane %v621, 2
        %v623 = vmax.f32 %v621, %v622
        %v624 = vrot.slane %v623, 1
        %v625 = vmax.f32 %v623, %v624
        %v626 = vsub.f32 %v589, %v618
        %v627 = vsub.f32 %v609, %v625
        %v628 = vmul.f32 %v626, 1.442695
        %v629 = vpow.pop %v628
        %v630 = vmul.f32 %v627, 1.442695
        %v631 = vpow.pop %v630
        %v632 = vsel %vm611, %v629, 0.0
        %v633 = vrot.slane %v632, 4
        %v634 = vadd.f32 %v632, %v633
        %v635 = vrot.slane %v634, 2
        %v636 = vadd.f32 %v634, %v635
        %v637 = vrot.slane %v636, 1
        %v638 = vadd.f32 %v636, %v637
        %v639 = vsel %vm611, %v631, 0.0
        %v640 = vrot.slane %v639, 4
        %v641 = vadd.f32 %v639, %v640
        %v642 = vrot.slane %v641, 2
        %v643 = vadd.f32 %v641, %v642
        %v644 = vrot.slane %v643, 1
        %v645 = vadd.f32 %v643, %v644
        %v646 = vrcp.pop %v638
        %v647 = vmul.f32 %v638, %v646
        %v648 = vsub.f32 1.0, %v647
        %v649 = vmul.f32 %v646, %v648
        %v650 = vadd.f32 %v646, %v649
        %vm651 = vweird.f32 %v638
        %vm652 = vweird.f32 %v646
        %vm653 = vmor %vm651, %vm652
        %v654 = vsel %vm653, %v646, %v650
        %v655 = vand.u32 2147483647, %v638
        %vm656 = vcmp.eq.f32.partialorder %v655, 8.507059e+37
        %v657 = vand.u32 %v638, 2147483648
        %v658 = vor.u32 1.1754944e-38, %v657
        %v659 = vsel %vm656, %v658, %v654
        %v660 = vrcp.pop %v645
        %v661 = vmul.f32 %v645, %v660
        %v662 = vsub.f32 1.0, %v661
        %v663 = vmul.f32 %v660, %v662
        %v664 = vadd.f32 %v660, %v663
        %vm665 = vweird.f32 %v645
        %vm666 = vweird.f32 %v660
        %vm667 = vmor %vm665, %vm666
        %v668 = vsel %vm667, %v660, %v664
        %v669 = vand.u32 2147483647, %v645
        %vm670 = vcmp.eq.f32.partialorder %v669, 8.507059e+37
        %v671 = vand.u32 %v645, 2147483648
        %v672 = vor.u32 1.1754944e-38, %v671
        %v673 = vsel %vm670, %v672, %v668
        %v674 = vmul.f32 %v629, %v659
        %v675 = vmul.f32 %v631, %v673
        %v676 = vld [vmem:[%s7] sm:$0xff]
        %v677 = vld [vmem:[%s7 + $0x8] sm:$0xff]
        %v678 = vld [vmem:[%s7 + $0x10] sm:$0xff]
        %v679 = vld [vmem:[%s7 + $0x18] sm:$0xff]
        %v680 = vld [vmem:[%s7 + $0x20] sm:$0xff]
        %v681 = vld [vmem:[%s7 + $0x28] sm:$0xff]
        %v682 = vld [vmem:[%s7 + $0x30] sm:$0xff]
        %v683 = vld [vmem:[%s7 + $0x38] sm:$0xff]
        %v684 = vld [vmem:[%s7 + $0x40] sm:$0xff]
        %v685 = vld [vmem:[%s7 + $0x48] sm:$0xff]
        %v686 = vld [vmem:[%s7 + $0x50] sm:$0xff]
        %v687 = vld [vmem:[%s7 + $0x58] sm:$0xff]
        %v688 = vld [vmem:[%s7 + $0x60] sm:$0xf]
        %v689 = vld [vmem:[%s8] sm:$0xff]
        %v690 = vld [vmem:[%s8 + $0x8] sm:$0xff]
        %v691 = vld [vmem:[%s8 + $0x10] sm:$0xff]
        %v692 = vld [vmem:[%s8 + $0x18] sm:$0xff]
        %v693 = vld [vmem:[%s8 + $0x20] sm:$0xff]
        %v694 = vld [vmem:[%s8 + $0x28] sm:$0xff]
        %v695 = vld [vmem:[%s8 + $0x30] sm:$0xff]
        %v696 = vld [vmem:[%s8 + $0x38] sm:$0xff]
        %v697 = vld [vmem:[%s8 + $0x40] sm:$0xff]
        %v698 = vld [vmem:[%s8 + $0x48] sm:$0xff]
        %v699 = vld [vmem:[%s8 + $0x50] sm:$0xff]
        %v700 = vld [vmem:[%s8 + $0x58] sm:$0xff]
        %v701 = vld [vmem:[%s8 + $0x60] sm:$0xf]
        %703 = vset.pattern.permute.xlu0 0
        %704 = vperm.xlu0 %703, %v689
        %v705 = vpop.permute.xlu0 %704
        %708 = vset.pattern.permute.xlu0 0
        %709 = vperm.xlu0 %708, %v690
        %v710 = vpop.permute.xlu0 %709
        %713 = vset.pattern.permute.xlu0 0
        %714 = vperm.xlu0 %713, %v691
        %v715 = vpop.permute.xlu0 %714
        %718 = vset.pattern.permute.xlu0 0
        %719 = vperm.xlu0 %718, %v692
        %v720 = vpop.permute.xlu0 %719
        %723 = vset.pattern.permute.xlu0 0
        %724 = vperm.xlu0 %723, %v693
        %v725 = vpop.permute.xlu0 %724
        %728 = vset.pattern.permute.xlu0 0
        %729 = vperm.xlu0 %728, %v694
        %v730 = vpop.permute.xlu0 %729
        %733 = vset.pattern.permute.xlu0 0
        %734 = vperm.xlu0 %733, %v695
        %v735 = vpop.permute.xlu0 %734
        %738 = vset.pattern.permute.xlu0 0
        %739 = vperm.xlu0 %738, %v696
        %v740 = vpop.permute.xlu0 %739
        %743 = vset.pattern.permute.xlu0 0
        %744 = vperm.xlu0 %743, %v697
        %v745 = vpop.permute.xlu0 %744
        %748 = vset.pattern.permute.xlu0 0
        %749 = vperm.xlu0 %748, %v698
        %v750 = vpop.permute.xlu0 %749
        %753 = vset.pattern.permute.xlu0 0
        %754 = vperm.xlu0 %753, %v699
        %v755 = vpop.permute.xlu0 %754
        %758 = vset.pattern.permute.xlu0 0
        %759 = vperm.xlu0 %758, %v700
        %v760 = vpop.permute.xlu0 %759
        %763 = vset.pattern.permute.xlu0 0
        %764 = vperm.xlu0 %763, %v701
        %v765 = vpop.permute.xlu0 %764
        %vm767 = vcmask 408576
        %v769 = vsel %vm767, %v676, 0
        %v772 = vsel %vm767, %v677, 0
        %v775 = vsel %vm767, %v678, 0
        %v778 = vsel %vm767, %v679, 0
        %v781 = vsel %vm767, %v680, 0
        %v784 = vsel %vm767, %v681, 0
        %v787 = vsel %vm767, %v682, 0
        %v790 = vsel %vm767, %v683, 0
        %v793 = vsel %vm767, %v684, 0
        %v796 = vsel %vm767, %v685, 0
        %v799 = vsel %vm767, %v686, 0
        %v802 = vsel %vm767, %v687, 0
        %v805 = vsel %vm767, %v688, 0
        %v808 = vsel %vm564, %v551, 0
        %v811 = vsel %vm564, %v552, 0
        %813 = vmatpush.msra.mxu0 0.0
        %814 = vmatpush.msra.mxu0 0.0
        %815 = vmatpush.msra.mxu0 0.0
        %816 = vmatpush.msra.mxu0 0.0
        %817 = vmatpush.msra.mxu0 0.0
        %818 = vmatpush.msra.mxu0 0.0
        %819 = vmatpush.msra.mxu0 0.0
        %820 = vmatpush.msra.mxu0 0.0
        %821 = vmatpush.msra.mxu0 0.0
        %822 = vmatpush.msra.mxu0 %v808
        %823 = vmatpush.msra.mxu0 %v549
        %824 = vmatpush.msra.mxu0 %v547
        %825 = vmatpush.msra.mxu0 %v545
        %826 = vmatpush.msra.mxu0 %v543
        %827 = vmatpush.msra.mxu0 %v541
        %828 = vmatpush.msra.mxu0 %v539
        %829 = vmatmul.f32.gmra.mxu0 %v769
        %v830 = vpop.f32.mrf.mxu0
        %v831 = vadd.f32 %v705, %v830
        %832 = vmatmul.f32.gmra.mxu0 %v772
        %v833 = vpop.f32.mrf.mxu0
        %v834 = vadd.f32 %v710, %v833
        %835 = vmatmul.f32.gmra.mxu0 %v775
        %v836 = vpop.f32.mrf.mxu0
        %v837 = vadd.f32 %v715, %v836
        %838 = vmatmul.f32.gmra.mxu0 %v778
        %v839 = vpop.f32.mrf.mxu0
        %v840 = vadd.f32 %v720, %v839
        %841 = vmatmul.f32.gmra.mxu0 %v781
        %v842 = vpop.f32.mrf.mxu0
        %v843 = vadd.f32 %v725, %v842
        %844 = vmatmul.f32.gmra.mxu0 %v784
        %v845 = vpop.f32.mrf.mxu0
        %v846 = vadd.f32 %v730, %v845
        %847 = vmatmul.f32.gmra.mxu0 %v787
        %v848 = vpop.f32.mrf.mxu0
        %v849 = vadd.f32 %v735, %v848
        %850 = vmatmul.f32.gmra.mxu0 %v790
        %v851 = vpop.f32.mrf.mxu0
        %v852 = vadd.f32 %v740, %v851
        %853 = vmatmul.f32.gmra.mxu0 %v793
        %v854 = vpop.f32.mrf.mxu0
        %v855 = vadd.f32 %v745, %v854
        %856 = vmatmul.f32.gmra.mxu0 %v796
        %v857 = vpop.f32.mrf.mxu0
        %v858 = vadd.f32 %v750, %v857
        %859 = vmatmul.f32.gmra.mxu0 %v799
        %v860 = vpop.f32.mrf.mxu0
        %v861 = vadd.f32 %v755, %v860
        %862 = vmatmul.f32.gmra.mxu0 %v802
        %v863 = vpop.f32.mrf.mxu0
        %v864 = vadd.f32 %v760, %v863
        %865 = vmatmul.f32.gmra.mxu0 %v805
        %v866 = vpop.f32.mrf.mxu0
        %v867 = vadd.f32 %v765, %v866
        %868 = vdwg.mxu0
        %869 = vmatpush.msra.mxu0 0.0
        %870 = vmatpush.msra.mxu0 0.0
        %871 = vmatpush.msra.mxu0 0.0
        %872 = vmatpush.msra.mxu0 0.0
        %873 = vmatpush.msra.mxu0 0.0
        %874 = vmatpush.msra.mxu0 0.0
        %875 = vmatpush.msra.mxu0 0.0
        %876 = vmatpush.msra.mxu0 0.0
        %877 = vmatpush.msra.mxu0 0.0
        %878 = vmatpush.msra.mxu0 %v811
        %879 = vmatpush.msra.mxu0 %v550
        %880 = vmatpush.msra.mxu0 %v548
        %881 = vmatpush.msra.mxu0 %v546
        %882 = vmatpush.msra.mxu0 %v544
        %883 = vmatpush.msra.mxu0 %v542
        %884 = vmatpush.msra.mxu0 %v540
        %885 = vmatmul.f32.gmra.mxu0 %v769
        %v886 = vpop.f32.mrf.mxu0
        %v887 = vadd.f32 %v705, %v886
        %888 = vmatmul.f32.gmra.mxu0 %v772
        %v889 = vpop.f32.mrf.mxu0
        %v890 = vadd.f32 %v710, %v889
        %891 = vmatmul.f32.gmra.mxu0 %v775
        %v892 = vpop.f32.mrf.mxu0
        %v893 = vadd.f32 %v715, %v892
        %894 = vmatmul.f32.gmra.mxu0 %v778
        %v895 = vpop.f32.mrf.mxu0
        %v896 = vadd.f32 %v720, %v895
        %897 = vmatmul.f32.gmra.mxu0 %v781
        %v898 = vpop.f32.mrf.mxu0
        %v899 = vadd.f32 %v725, %v898
        %900 = vmatmul.f32.gmra.mxu0 %v784
        %v901 = vpop.f32.mrf.mxu0
        %v902 = vadd.f32 %v730, %v901
        %903 = vmatmul.f32.gmra.mxu0 %v787
        %v904 = vpop.f32.mrf.mxu0
        %v905 = vadd.f32 %v735, %v904
        %906 = vmatmul.f32.gmra.mxu0 %v790
        %v907 = vpop.f32.mrf.mxu0
        %v908 = vadd.f32 %v740, %v907
        %909 = vmatmul.f32.gmra.mxu0 %v793
        %v910 = vpop.f32.mrf.mxu0
        %v911 = vadd.f32 %v745, %v910
        %912 = vmatmul.f32.gmra.mxu0 %v796
        %v913 = vpop.f32.mrf.mxu0
        %v914 = vadd.f32 %v750, %v913
        %915 = vmatmul.f32.gmra.mxu0 %v799
        %v916 = vpop.f32.mrf.mxu0
        %v917 = vadd.f32 %v755, %v916
        %918 = vmatmul.f32.gmra.mxu0 %v802
        %v919 = vpop.f32.mrf.mxu0
        %v920 = vadd.f32 %v760, %v919
        %921 = vmatmul.f32.gmra.mxu0 %v805
        %v922 = vpop.f32.mrf.mxu0
        %v923 = vadd.f32 %v765, %v922
        %924 = vdwg.mxu0
        %v925 = vmax.f32 %v831, 0.0
        %v926 = vmax.f32 %v887, 0.0
        %v927 = vmax.f32 %v834, 0.0
        %v928 = vmax.f32 %v890, 0.0
        %v929 = vmax.f32 %v837, 0.0
        %v930 = vmax.f32 %v893, 0.0
        %v931 = vmax.f32 %v840, 0.0
        %v932 = vmax.f32 %v896, 0.0
        %v933 = vmax.f32 %v843, 0.0
        %v934 = vmax.f32 %v899, 0.0
        %v935 = vmax.f32 %v846, 0.0
        %v936 = vmax.f32 %v902, 0.0
        %v937 = vmax.f32 %v849, 0.0
        %v938 = vmax.f32 %v905, 0.0
        %v939 = vmax.f32 %v852, 0.0
        %v940 = vmax.f32 %v908, 0.0
        %v941 = vmax.f32 %v855, 0.0
        %v942 = vmax.f32 %v911, 0.0
        %v943 = vmax.f32 %v858, 0.0
        %v944 = vmax.f32 %v914, 0.0
        %v945 = vmax.f32 %v861, 0.0
        %v946 = vmax.f32 %v917, 0.0
        %v947 = vmax.f32 %v864, 0.0
        %v948 = vmax.f32 %v920, 0.0
        %v949 = vmax.f32 %v867, 0.0
        %v950 = vmax.f32 %v923, 0.0
        %v951 = vld [vmem:[%s9] sm:$0x1f]
        %v952 = vld [vmem:[%s10] sm:$0x1f]
        %954 = vset.pattern.permute.xlu0 0
        %955 = vperm.xlu0 %954, %v952
        %v956 = vpop.permute.xlu0 %955
        %vm958 = vcmask 818176
        %v960 = vsel %vm958, %v951, 0
        %vm962 = vcmask 1043456
        %v964 = vsel %vm962, %v949, 0
        %v967 = vsel %vm962, %v950, 0
        %969 = vmatpush.msra.mxu0 0.0
        %970 = vmatpush.msra.mxu0 0.0
        %971 = vmatpush.msra.mxu0 0.0
        %972 = vmatpush.msra.mxu0 %v964
        %973 = vmatpush.msra.mxu0 %v947
        %974 = vmatpush.msra.mxu0 %v945
        %975 = vmatpush.msra.mxu0 %v943
        %976 = vmatpush.msra.mxu0 %v941
        %977 = vmatpush.msra.mxu0 %v939
        %978 = vmatpush.msra.mxu0 %v937
        %979 = vmatpush.msra.mxu0 %v935
        %980 = vmatpush.msra.mxu0 %v933
        %981 = vmatpush.msra.mxu0 %v931
        %982 = vmatpush.msra.mxu0 %v929
        %983 = vmatpush.msra.mxu0 %v927
        %984 = vmatpush.msra.mxu0 %v925
        %985 = vmatmul.f32.gmra.mxu0 %v960
        %v986 = vpop.f32.mrf.mxu0
        %v987 = vadd.f32 %v956, %v986
        %988 = vdwg.mxu0
        %989 = vmatpush.msra.mxu0 0.0
        %990 = vmatpush.msra.mxu0 0.0
        %991 = vmatpush.msra.mxu0 0.0
        %992 = vmatpush.msra.mxu0 %v967
        %993 = vmatpush.msra.mxu0 %v948
        %994 = vmatpush.msra.mxu0 %v946
        %995 = vmatpush.msra.mxu0 %v944
        %996 = vmatpush.msra.mxu0 %v942
        %997 = vmatpush.msra.mxu0 %v940
        %998 = vmatpush.msra.mxu0 %v938
        %999 = vmatpush.msra.mxu0 %v936
        %1000 = vmatpush.msra.mxu0 %v934
        %1001 = vmatpush.msra.mxu0 %v932
        %1002 = vmatpush.msra.mxu0 %v930
        %1003 = vmatpush.msra.mxu0 %v928
        %1004 = vmatpush.msra.mxu0 %v926
        %1005 = vmatmul.f32.gmra.mxu0 %v960
        %v1006 = vpop.f32.mrf.mxu0
        %v1007 = vadd.f32 %v956, %v1006
        %1008 = vdwg.mxu0
        %v1009 = vmul.f32 %v674, %v987
        %v1010 = vmul.f32 %v675, %v1007
        %v1011 = vsel %vm611, %v1009, 0.0
        %v1012 = vrot.slane %v1011, 4
        %v1013 = vadd.f32 %v1011, %v1012
        %v1014 = vrot.slane %v1013, 2
        %v1015 = vadd.f32 %v1013, %v1014
        %v1016 = vrot.slane %v1015, 1
        %v1017 = vadd.f32 %v1015, %v1016
        %v1018 = vsel %vm611, %v1010, 0.0
        %v1019 = vrot.slane %v1018, 4
        %v1020 = vadd.f32 %v1018, %v1019
        %v1021 = vrot.slane %v1020, 2
        %v1022 = vadd.f32 %v1020, %v1021
        %v1023 = vrot.slane %v1022, 1
        %v1024 = vadd.f32 %v1022, %v1023
        %v1027 = vrot.slane %v1024, 7
        %vm1028 = vcmask 1040384
        %v1029 = vsel %vm1028, %v1017, %v1027
        %v1031 = vlaneseq
        %vm1032 = vcmp.ge.s32.totalorder %v1031, 0
        %vm1033 = vcmp.lt.s32.totalorder %v1031, 256
        %vm1034 = vmand %vm1032, %vm1033
        %1035 = vst.msk [vmem:[%s378] sm:$0x3] %vm1034, %v1029
        %s1036 = sand.u32 %s269, 1
        %s1037 = scalar_lea.sflag [#allocation3], %s1036
        %s1038 = sand.u32 %s269, 1
        %s1039 = smul.addr %s1038, 2
        %s1040 = scalar_lea.vmem [#allocation2], %s1039
        // Predicated region
        $region65: #{tpu_custom_call.1} parent=63 // pred_check
          %p1041 = pneg %p279
        $region66: #{tpu_custom_call.1} parent=63 // pred_check_branch
          %1043 = sbr.rel (%p1041) target = $region68
        $region67: #{tpu_custom_call.1} parent=63 // pred_region
          %s1044 = smul.u32 2, %s25
          %1046 = vsyncadd %s1037, 0
          %s1047 = scalar_lea.hbm %s11, %s1044
          %s1049 = sshll.u32 %s1040, 4
          %s1050 = int_to_ptr.vmem [resolvable:$true] %s1049
          %s1051 = sshll.u32 %s1047, 4
          %s1052 = int_to_ptr.hbm [resolvable:$true] %s1051
          %1054 = dma.vmem_to_hbm [thread:$0]  %s1050, 32, %s1052, %s1037
        $region68: #{tpu_custom_call.1} parent=63 // pred_fallthru
          _
      $region64: #{tpu_custom_call.1} parent=5 // pred_fallthru
        _
      %p1055 = scmp.le.s32.totalorder 2, %s20
      // Predicated region
      $region69: #{tpu_custom_call.1} parent=5 // pred_check
        %p1056 = pneg %p1055
      $region70: #{tpu_custom_call.1} parent=5 // pred_check_branch
        %1058 = sbr.rel (%p1056) target = $region72
      $region71: #{tpu_custom_call.1} parent=5 // pred_region
        %s1059 = ssub.s32 %s20, 2
        // Predicated region
        $region73: #{tpu_custom_call.1} parent=71 // pred_check
          %p1060 = pneg %p285
        $region74: #{tpu_custom_call.1} parent=71 // pred_check_branch
          %1062 = sbr.rel (%p1060) target = $region76
        $region75: #{tpu_custom_call.1} parent=71 // pred_region
          %s1063 = sand.u32 %s270, 1
          %s1064 = scalar_lea.sflag [#allocation3], %s1063
          %s1065 = sand.u32 %s270, 1
          %s1066 = smul.addr %s1065, 2
          %s1067 = scalar_lea.vmem [#allocation2], %s1066
          %1069 = dma.done %s1064, 32
        $region76: #{tpu_custom_call.1} parent=71 // pred_fallthru
          _
      $region72: #{tpu_custom_call.1} parent=5 // pred_fallthru
        _
    $region6: #{tpu_custom_call.1} parent=1 // loop_footer
      %s24 = sadd.s32 1, %s20
    $region7: #{tpu_custom_call.1} parent=1 // loop_footer_branch
      %19 = sbr.rel target = $region3
    $region8: #{tpu_custom_call.1} parent=1 // loop_exit
      _
    %1070 = vsyncpa [#allocation3], 1
    %s1071 = scalar_lea.sflag [#allocation3], 1
    %1072 = vsyncpa %s1071, 1

</llo_original>
